<compile_context>
chip_gen: v7x
topology: tpu7x:2x2x1
jax: 0.10.0
libtpu: 0.0.40
codegen_flags: <defaults>
</compile_context>

<pallas_src>
import functools

import jax
import jax.numpy as jnp
from jax.experimental import pallas as pl
from jax.experimental.pallas import tpu as pltpu


# ------------------------------ Pallas kernel -------------------------------

def _fused_transition_kernel(p_ref, sb_ref, w_ref, o_ref, *, compute_dtype):
    """BN + ReLU + composed (1x1 then 2x2/s2) capsule conv for one batch group.

    p_ref : (K, L)   f32  patches; rows ordered (kh, kw, ch_in*n_in), cols (b, ho, wo)
    sb_ref: (K, 2)   f32  folded BN affine: [:, 0] = scale, [:, 1] = bias
    w_ref : (Cout, K)     composed weight W_eff^T (same K row ordering), compute_dtype
    o_ref : (Cout, L)     output; cols (b, ho, wo) -> lane-dense (batch*spatial on lanes)
    """
    x = p_ref[...]                                                 # (K, L) f32
    # BN + ReLU in f32 (exact; v5e VPU has no bf16). Each input element appears
    # exactly once in the patch matrix, so the per-row affine == BN applied to x.
    h = jnp.maximum(x * sb_ref[:, 0:1] + sb_ref[:, 1:2], 0.0)
    # Cast only at the MXU boundary; accumulate in f32 on the MXU.
    o_ref[...] = jnp.dot(w_ref[...], h.astype(compute_dtype),
                         preferred_element_type=jnp.float32).astype(o_ref.dtype)


# ------------------------------ block-size heuristic -------------------------

def _choose_batch_group(B, N, K, itemsize, max_block_bytes=8 << 20):
    """Batches per grid step (Bg divides B). Lane width of a block is Bg*N.

    Preference order (measured TPU levers):
      1. lane width a multiple of 128 (dense vst instead of masked vst.msk),
      2. lane width in 512..4096 (amortize ~0.35 us per grid step),
      3. keep >=2 grid steps (v7x megacore sharding),
      4. lane width near ~1024.
    Blocks are capped at 8 MiB so the double-buffered plan stays v7x-safe (64 MiB VMEM);
    v5e/v6e (128 MiB) trivially accommodate the same plan.
    """
    divisors = [d for d in range(1, B + 1) if B % d == 0]
    # BlockSpec constraint: block last dim must be a multiple of 128 or cover the array.
    valid = [d for d in divisors if (d * N) % 128 == 0 or d == B]
    fits = [d for d in valid if K * d * N * itemsize <= max_block_bytes]
    cands = fits if fits else [min(valid)]

    def score(d):
        lanes = d * N
        return ((lanes % 128) == 0,
                512 <= lanes <= 4096,
                (B // d) >= 2,
                -abs(lanes - 1024))

    return max(cands, key=score)


# ------------------------------ Forward wrapper ------------------------------

def transition_block_forward(x, gamma, beta, run_mean, run_var, w1, w2,
                             ch_out, n_out, eps=1e-5,
                             compute_dtype=jnp.bfloat16,
                             out_dtype=jnp.float32):
    """x: (B, ch_in, n_in, H, W) float32, matches PyTorch BatchNorm3d input layout.

    out_dtype can be set to bf16 if the downstream DenseNet block accepts it
    (halves output HBM writeback); f32 kept as default to match the reference.
    """
    B, ch_in, n_in, H, W = x.shape
    assert H % 2 == 0 and W % 2 == 0, "2x2/stride-2 shrink requires even H, W"
    Cin = ch_in * n_in
    Cout = ch_out * n_out
    Ho, Wo = H // 2, W // 2
    K = 4 * Cin            # fused contraction axis: (kh, kw, cin_flat)
    N = Ho * Wo            # spatial positions per batch
    L = B * N              # lane axis: (b, ho, wo)

    # --- fold BatchNorm3d (inference) into a per-K-row affine ---
    scale_c = gamma * jax.lax.rsqrt(run_var + eps)                # (ch_in,)
    bias_c = beta - run_mean * scale_c                            # (ch_in,)
    scale = jnp.tile(jnp.repeat(scale_c, n_in), 4)                # (K,), row = (kh,kw,c,n)
    bias = jnp.tile(jnp.repeat(bias_c, n_in), 4)
    sb = jnp.stack([scale, bias], axis=1).astype(jnp.float32)     # (K, 2)

    # --- compose the 1x1 and 2x2/s2 capsule convs into one weight (inference only) ---
    # W_eff^T[o, (kh, kw, c)] = sum_m w2[o, m, kh, kw] * w1[m, c]
    w1m = w1.reshape(Cout, Cin).astype(jnp.float32)
    w2m = w2.reshape(Cout, Cout, 2, 2).astype(jnp.float32)
    w_eff = jnp.einsum('ompq,mc->opqc', w2m, w1m).reshape(Cout, K)
    w_eff = w_eff.astype(compute_dtype)

    # --- 2x2/stride-2 im2col with batch folded onto lanes: (K, B*Ho*Wo).
    #     stride == kernel -> pure relayout (each element used exactly once);
    #     allow_input_fusion lets XLA fold it into the kernel's input DMA.
    #     Kept in f32 so the in-kernel BN+ReLU is exact (cast happens at MXU boundary).
    xr = x.reshape(B, Cin, Ho, 2, Wo, 2)                          # (b, c, ho, kh, wo, kw)
    patches = jnp.transpose(xr, (3, 5, 1, 0, 2, 4)).reshape(K, L) # rows (kh,kw,c), cols (b,ho,wo)
    patches = patches.astype(jnp.float32)

    # --- batch-grouped, lane-dense grid ---
    Bg = _choose_batch_group(B, N, K, 4)
    G = B // Bg
    Lg = Bg * N

    out = pl.pallas_call(
        functools.partial(_fused_transition_kernel, compute_dtype=compute_dtype),
        out_shape=jax.ShapeDtypeStruct((Cout, L), out_dtype),
        grid_spec=pl.GridSpec(
            grid=(G,),                      # "parallel" batch groups (v7x megacore when G>=2)
            in_specs=[
                pl.BlockSpec((K, Lg), lambda g: (0, g)),          # per-group patches
                pl.BlockSpec((K, 2), lambda g: (0, 0)),           # constant BN affine
                pl.BlockSpec((Cout, K), lambda g: (0, 0)),        # constant W_eff^T
            ],
            out_specs=pl.BlockSpec((Cout, Lg), lambda g: (0, g)),
        ),
        compiler_params=pltpu.CompilerParams(
            dimension_semantics=("parallel",),
            # 8 MiB block cap + double-buffering + in-kernel f32 temporaries stay
            # well under this; 48 MiB keeps headroom yet fits v7x's 64 MiB VMEM.
            vmem_limit_bytes=48 * 1024 * 1024,
            # Let XLA fuse the im2col transpose into the patches input DMA.
            allow_input_fusion=[True, False, False],
        ),
    )(patches, sb, w_eff)

    # (Cout, B*Ho*Wo) -> (B, ch_out, n_out, Ho, Wo): small output relayout (layout plumbing).
    y = out.reshape(Cout, B, Ho, Wo)
    return jnp.transpose(y, (1, 0, 2, 3)).reshape(B, ch_out, n_out, Ho, Wo)


# ------------------------------ Pure-JAX reference ---------------------------

def reference_forward(x, gamma, beta, run_mean, run_var, w1, w2, ch_out, n_out, eps=1e-5):
    B, ch_in, n_in, H, W = x.shape
    bshape = (1, ch_in, 1, 1, 1)
    xb = (x - run_mean.reshape(bshape)) * jax.lax.rsqrt(run_var + eps).reshape(bshape)
    xb = xb * gamma.reshape(bshape) + beta.reshape(bshape)
    h = jnp.maximum(xb, 0.0)
    w1r = w1.reshape(ch_out, n_out, ch_in, n_in)
    y1 = jnp.einsum('omcn,bcnhw->bomhw', w1r, h)
    Ho, Wo = H // 2, W // 2
    w2r = w2.reshape(ch_out, n_out, ch_out, n_out, 2, 2)
    y1p = y1.reshape(B, ch_out, n_out, Ho, 2, Wo, 2)
    y2 = jnp.einsum('omcnpq,bcnipjq->bomij', w2r, y1p)
    return y2


# ----------------------------------- main ------------------------------------

if __name__ == "__main__":
    B, ch_in, n_in, H, W = 2, 4, 4, 16, 16
    ch_out, n_out = 4, 4
    drop_rate = 0.0  # inference-mode: dropout is identity regardless

    key = jax.random.PRNGKey(0)
    ks = jax.random.split(key, 7)
    x = jax.random.normal(ks[0], (B, ch_in, n_in, H, W), jnp.float32)
    gamma = jax.random.uniform(ks[1], (ch_in,), jnp.float32, 0.5, 1.5)
    beta = 0.1 * jax.random.normal(ks[2], (ch_in,), jnp.float32)
    run_mean = 0.1 * jax.random.normal(ks[3], (ch_in,), jnp.float32)
    run_var = jax.random.uniform(ks[4], (ch_in,), jnp.float32, 0.5, 1.5)
    # Capsule conv weights (PyTorch Conv2d layout over flattened capsules, bias=False):
    w1 = 0.1 * jax.random.normal(ks[5], (ch_out * n_out, ch_in * n_in), jnp.float32)          # 1x1
    w2 = 0.1 * jax.random.normal(ks[6], (ch_out * n_out, ch_out * n_out, 2, 2), jnp.float32)  # 2x2/s2

    ref = reference_forward(x, gamma, beta, run_mean, run_var, w1, w2, ch_out, n_out)

    # Exact (f32) path: validates the fused W_eff math against the two-conv reference.
    out_f32 = jax.block_until_ready(
        transition_block_forward(x, gamma, beta, run_mean, run_var, w1, w2,
                                 ch_out, n_out, compute_dtype=jnp.float32))
    assert out_f32.shape == (B, ch_out, n_out, H // 2, W // 2), out_f32.shape
    assert jnp.allclose(out_f32, ref, atol=1e-4, rtol=1e-4), \
        float(jnp.max(jnp.abs(out_f32 - ref)))

    # Fast (default) path: BN+ReLU exact in f32, bf16 MXU operands, f32 accumulation.
    out = jax.block_until_ready(
        transition_block_forward(x, gamma, beta, run_mean, run_var, w1, w2,
                                 ch_out, n_out))
    assert out.shape == (B, ch_out, n_out, H // 2, W // 2), out.shape
    # bf16-operand tolerance (inputs ~N(0,1), weights ~0.1): errors are well below this.
    assert jnp.allclose(out, ref, atol=2e-2, rtol=2e-2), \
        float(jnp.max(jnp.abs(out - ref)))

    print("KERNEL_OK")
</pallas_src>

<mosaic_0001>
module attributes {stable_mosaic.version = 11 : i64} {
  func.func @_fused_transition_kernel(%arg0: i32, %arg1: memref<64x128xf32, #tpu.memory_space<vmem>>, %arg2: memref<64x2xf32, #tpu.memory_space<vmem>>, %arg3: memref<16x64xf32, #tpu.memory_space<vmem>>, %arg4: memref<16x128xf32, #tpu.memory_space<vmem>>) attributes {dimension_semantics = [#tpu.dimension_semantics<parallel>], iteration_bounds = array<i64: 1>, scalar_prefetch = 0 : i64, scratch_operands = 0 : i64, tpu.core_type = #tpu.core_type<tc>, window_params = [{transform_indices = @transform_0, window_bounds = array<i64: 64, 128>}, {pipeline_mode = #tpu.pipeline_mode<synchronous>, transform_indices = @transform_1, window_bounds = array<i64: 64, 2>}, {pipeline_mode = #tpu.pipeline_mode<synchronous>, transform_indices = @transform_2, window_bounds = array<i64: 16, 64>}, {transform_indices = @transform_3, window_bounds = array<i64: 16, 128>}]} {
    %c0 = arith.constant 0 : index
    %c0_0 = arith.constant 0 : index
    %0 = vector.load %arg1[%c0, %c0_0] : memref<64x128xf32, #tpu.memory_space<vmem>>, vector<64x128xf32>
    %c0_1 = arith.constant 0 : index
    %c0_2 = arith.constant 0 : index
    %1 = vector.load %arg2[%c0_1, %c0_2] : memref<64x2xf32, #tpu.memory_space<vmem>>, vector<64x1xf32>
    %2 = vector.broadcast %1 : vector<64x1xf32> to vector<64x128xf32>
    %3 = arith.mulf %0, %2 : vector<64x128xf32>
    %c0_3 = arith.constant 0 : index
    %c1 = arith.constant 1 : index
    %4 = vector.load %arg2[%c0_3, %c1] : memref<64x2xf32, #tpu.memory_space<vmem>>, vector<64x1xf32>
    %5 = vector.broadcast %4 : vector<64x1xf32> to vector<64x128xf32>
    %6 = arith.addf %3, %5 : vector<64x128xf32>
    %cst = arith.constant 0.000000e+00 : f32
    %7 = vector.broadcast %cst : f32 to vector<64x128xf32>
    %8 = arith.maximumf %6, %7 : vector<64x128xf32>
    %c0_4 = arith.constant 0 : index
    %c0_5 = arith.constant 0 : index
    %9 = vector.load %arg3[%c0_4, %c0_5] : memref<16x64xf32, #tpu.memory_space<vmem>>, vector<16x64xf32>
    %cst_6 = arith.constant dense<0.000000e+00> : vector<16x128xf32>
    %10 = tpu.matmul %9, %8, %cst_6 {dimension_numbers = #tpu.dot_dimension_numbers<[1], [0], [0], [1], [0, 0, 1, 1], [], []>} : vector<16x64xf32>, vector<64x128xf32>, vector<16x128xf32> -> vector<16x128xf32>
    %c0_7 = arith.constant 0 : index
    %c0_8 = arith.constant 0 : index
    %11 = vector.load %arg4[%c0_7, %c0_8] : memref<16x128xf32, #tpu.memory_space<vmem>>, vector<16x128xf32>
    tpu.vector_store %arg4[%c0_7, %c0_8], %10 {strides = array<i32>} : memref<16x128xf32, #tpu.memory_space<vmem>>, vector<16x128xf32>,
    return
  }
  func.func @transform_0(%arg0: i32) -> (i32, i32) {
    %c0_i32 = arith.constant 0 : i32
    %c0_i32_0 = arith.constant 0 : i32
    return %c0_i32, %arg0 : i32, i32
  }
  func.func @transform_1(%arg0: i32) -> (i32, i32) {
    %c0_i32 = arith.constant 0 : i32
    %c0_i32_0 = arith.constant 0 : i32
    %c0_i32_1 = arith.constant 0 : i32
    return %c0_i32, %c0_i32_0 : i32, i32
  }
  func.func @transform_2(%arg0: i32) -> (i32, i32) {
    %c0_i32 = arith.constant 0 : i32
    %c0_i32_0 = arith.constant 0 : i32
    %c0_i32_1 = arith.constant 0 : i32
    return %c0_i32, %c0_i32_0 : i32, i32
  }
  func.func @transform_3(%arg0: i32) -> (i32, i32) {
    %c0_i32 = arith.constant 0 : i32
    %c0_i32_0 = arith.constant 0 : i32
    return %c0_i32, %arg0 : i32, i32
  }
}

</mosaic_0001>

<llo_original>
// kernel: tpu_custom_call.1
$region0: #{tpu_custom_call.1}
  #allocation0 [shape = 'u32[]', space=smem, size = 0x4, offset = 0x4, fixed_abs, tag = 'smem constant byte address 0x4 - core index']
  #allocation1 [shape = 'u32[144,128]{1,0:T(1,128)}', space=vmem, size = 0x12000, scoped, tag = 'internal scratch']
  %s0 = inlined_call_operand.vmem [shape: f32[64,128], index: 0, kind: input, shape index: {}]
  %s1 = inlined_call_operand.vmem [shape: f32[64,2], index: 1, kind: input, shape index: {}]
  %s2 = inlined_call_operand.hbm [shape: f32[16,64], index: 2, kind: input, shape index: {}]
  %s3 = inlined_call_operand.hbm [shape: f32[16,128], index: 3, kind: output, shape index: {}]
  %s4 = sld [smem:[#allocation0]]
  $region26: #{tpu_custom_call.1} parent=0
    _
  %s6 = ssub.s32 1, %s4
  %s7 = scalar_select 0, %s6, %s4
  $region1: #{tpu_custom_call.1} parent=0
    #allocation2 [shape = 'u8[8192]{0}', space=vmem, size = 0x2000, scoped, tag = 'input window, operand 2, single buffered']
    #allocation3 [shape = 's32[1]{0}', space=sflag, size = 0x4, scoped, tag = 'scoped memory for tpu_custom_call.1']
    #allocation4 [shape = 's32[1]{0}', space=sflag, size = 0x4, scoped, tag = 'scoped memory for tpu_custom_call.1']
    #allocation5 [shape = 'u8[8192]{0}', space=vmem, size = 0x2000, scoped, tag = 'output window, operand 0, single buffered']
    %8 = vsyncpa [#allocation3], 0
    %9 = vsyncpa [#allocation4], 0
    // Predicated region
    $region2: #{tpu_custom_call.1} parent=1 // pred_check
      _
    $region3: #{tpu_custom_call.1} parent=1 // pred_check_branch
      %11 = sbr.rel (0) target = $region5
    $region4: #{tpu_custom_call.1} parent=1 // pred_region
      _
    $region5: #{tpu_custom_call.1} parent=1 // pred_fallthru
      _
    // Predicated region
    $region6: #{tpu_custom_call.1} parent=1 // pred_check
      _
    $region7: #{tpu_custom_call.1} parent=1 // pred_check_branch
      %13 = sbr.rel (0) target = $region9
    $region8: #{tpu_custom_call.1} parent=1 // pred_region
      _
    $region9: #{tpu_custom_call.1} parent=1 // pred_fallthru
      _
    // Predicated region
    $region10: #{tpu_custom_call.1} parent=1 // pred_check
      _
    $region11: #{tpu_custom_call.1} parent=1 // pred_check_branch
      %15 = sbr.rel (0) target = $region13
    $region12: #{tpu_custom_call.1} parent=1 // pred_region
      %s17 = ssub.s32 256, 256
      %18 = vsyncadd [#allocation3], %s17
      %s19 = sshll.u32 [#allocation2], 4
      %s20 = int_to_ptr.vmem [resolvable:$true] %s19
      %25 = dma.hbm_to_vmem [thread:$0]  %s2, 256, %s20, [#allocation3], 128, 128, 8
    $region13: #{tpu_custom_call.1} parent=1 // pred_fallthru
      _
    // Predicated region
    $region14: #{tpu_custom_call.1} parent=1 // pred_check
      _
    $region15: #{tpu_custom_call.1} parent=1 // pred_check_branch
      %27 = sbr.rel (0) target = $region17
    $region16: #{tpu_custom_call.1} parent=1 // pred_region
      %28 = dma.done [#allocation3], 256
    $region17: #{tpu_custom_call.1} parent=1 // pred_fallthru
      _
    %v29 = vld [vmem:[%s0] sm:$0xff]
    %v30 = vld [vmem:[%s0 + $0x8] sm:$0xff]
    %v31 = vld [vmem:[%s0 + $0x10] sm:$0xff]
    %v32 = vld [vmem:[%s0 + $0x18] sm:$0xff]
    %v33 = vld [vmem:[%s0 + $0x20] sm:$0xff]
    %v34 = vld [vmem:[%s0 + $0x28] sm:$0xff]
    %v35 = vld [vmem:[%s0 + $0x30] sm:$0xff]
    %v36 = vld [vmem:[%s0 + $0x38] sm:$0xff]
    %v37 = vld [vmem:[%s1] sm:$0xff]
    %v38 = vld [vmem:[%s1 + $0x8] sm:$0xff]
    %v39 = vld [vmem:[%s1 + $0x10] sm:$0xff]
    %v40 = vld [vmem:[%s1 + $0x18] sm:$0xff]
    %v41 = vld [vmem:[%s1 + $0x20] sm:$0xff]
    %v42 = vld [vmem:[%s1 + $0x28] sm:$0xff]
    %v43 = vld [vmem:[%s1 + $0x30] sm:$0xff]
    %v44 = vld [vmem:[%s1 + $0x38] sm:$0xff]
    %46 = vset.pattern.permute.xlu0 0
    %47 = vperm.xlu0 %46, %v37
    %v48 = vpop.permute.xlu0 %47
    %51 = vset.pattern.permute.xlu0 0
    %52 = vperm.xlu0 %51, %v38
    %v53 = vpop.permute.xlu0 %52
    %56 = vset.pattern.permute.xlu0 0
    %57 = vperm.xlu0 %56, %v39
    %v58 = vpop.permute.xlu0 %57
    %61 = vset.pattern.permute.xlu0 0
    %62 = vperm.xlu0 %61, %v40
    %v63 = vpop.permute.xlu0 %62
    %66 = vset.pattern.permute.xlu0 0
    %67 = vperm.xlu0 %66, %v41
    %v68 = vpop.permute.xlu0 %67
    %71 = vset.pattern.permute.xlu0 0
    %72 = vperm.xlu0 %71, %v42
    %v73 = vpop.permute.xlu0 %72
    %76 = vset.pattern.permute.xlu0 0
    %77 = vperm.xlu0 %76, %v43
    %v78 = vpop.permute.xlu0 %77
    %81 = vset.pattern.permute.xlu0 0
    %82 = vperm.xlu0 %81, %v44
    %v83 = vpop.permute.xlu0 %82
    %v85 = vmul.f32 %v29, %v48
    %v86 = vmul.f32 %v30, %v53
    %v87 = vmul.f32 %v31, %v58
    %v88 = vmul.f32 %v32, %v63
    %v89 = vmul.f32 %v33, %v68
    %v90 = vmul.f32 %v34, %v73
    %v91 = vmul.f32 %v35, %v78
    %v92 = vmul.f32 %v36, %v83
    %93 = vset.pattern.permute.xlu0 1
    %94 = vperm.xlu0 %93, %v37
    %v95 = vpop.permute.xlu0 %94
    %97 = vset.pattern.permute.xlu0 1
    %98 = vperm.xlu0 %97, %v38
    %v99 = vpop.permute.xlu0 %98
    %101 = vset.pattern.permute.xlu0 1
    %102 = vperm.xlu0 %101, %v39
    %v103 = vpop.permute.xlu0 %102
    %105 = vset.pattern.permute.xlu0 1
    %106 = vperm.xlu0 %105, %v40
    %v107 = vpop.permute.xlu0 %106
    %109 = vset.pattern.permute.xlu0 1
    %110 = vperm.xlu0 %109, %v41
    %v111 = vpop.permute.xlu0 %110
    %113 = vset.pattern.permute.xlu0 1
    %114 = vperm.xlu0 %113, %v42
    %v115 = vpop.permute.xlu0 %114
    %117 = vset.pattern.permute.xlu0 1
    %118 = vperm.xlu0 %117, %v43
    %v119 = vpop.permute.xlu0 %118
    %121 = vset.pattern.permute.xlu0 1
    %122 = vperm.xlu0 %121, %v44
    %v123 = vpop.permute.xlu0 %122
    %v125 = vadd.f32 %v85, %v95
    %v126 = vadd.f32 %v86, %v99
    %v127 = vadd.f32 %v87, %v103
    %v128 = vadd.f32 %v88, %v107
    %v129 = vadd.f32 %v89, %v111
    %v130 = vadd.f32 %v90, %v115
    %v131 = vadd.f32 %v91, %v119
    %v132 = vadd.f32 %v92, %v123
    %v133 = vmax.f32 %v125, 0.0
    %v134 = vmax.f32 %v126, 0.0
    %v135 = vmax.f32 %v127, 0.0
    %v136 = vmax.f32 %v128, 0.0
    %v137 = vmax.f32 %v129, 0.0
    %v138 = vmax.f32 %v130, 0.0
    %v139 = vmax.f32 %v131, 0.0
    %v140 = vmax.f32 %v132, 0.0
    %v141 = vld [vmem:[#allocation2] sm:$0xff]
    %v142 = vld [vmem:[#allocation2 + $0x8] sm:$0xff]
    %vm143 = vcmask 523264
    %v145 = vsel %vm143, %v141, 0
    %v148 = vsel %vm143, %v142, 0
    %150 = vmatprep.subr.mxu0 0.0
    %151 = vmatpush1.msra.mxu0 %v133
    %152 = vmatprep.subr.mxu0 0.0
    %153 = vmatpush1.msra.mxu0 %v134
    %154 = vmatprep.subr.mxu0 0.0
    %155 = vmatpush1.msra.mxu0 %v135
    %156 = vmatprep.subr.mxu0 0.0
    %157 = vmatpush1.msra.mxu0 %v136
    %158 = vmatprep.subr.mxu0 0.0
    %159 = vmatpush1.msra.mxu0 %v137
    %160 = vmatprep.subr.mxu0 0.0
    %161 = vmatpush1.msra.mxu0 %v138
    %162 = vmatprep.subr.mxu0 0.0
    %163 = vmatpush1.msra.mxu0 %v139
    %164 = vmatprep.subr.mxu0 0.0
    %165 = vmatpush1.msra.mxu0 %v140
    %166 = vmatprep.subr.mxu0 0.0
    %167 = vmatpush1.msra.mxu0 0.0
    %168 = vmatprep.subr.mxu0 0.0
    %169 = vmatpush1.msra.mxu0 0.0
    %170 = vmatprep.subr.mxu0 0.0
    %171 = vmatpush1.msra.mxu0 0.0
    %172 = vmatprep.subr.mxu0 0.0
    %173 = vmatpush1.msra.mxu0 0.0
    %174 = vmatprep.subr.mxu0 0.0
    %175 = vmatpush1.msra.mxu0 0.0
    %176 = vmatprep.subr.mxu0 0.0
    %177 = vmatpush1.msra.mxu0 0.0
    %178 = vmatprep.subr.mxu0 0.0
    %179 = vmatpush1.msra.mxu0 0.0
    %180 = vmatprep.subr.mxu0 0.0
    %181 = vmatpush1.msra.mxu0 0.0
    %182 = vmatprep.subr.mxu0 0.0
    %183 = vmatpush1.msra.mxu0 0.0
    %184 = vmatprep.subr.mxu0 0.0
    %185 = vmatpush1.msra.mxu0 0.0
    %186 = vmatprep.subr.mxu0 0.0
    %187 = vmatpush1.msra.mxu0 0.0
    %188 = vmatprep.subr.mxu0 0.0
    %189 = vmatpush1.msra.mxu0 0.0
    %190 = vmatprep.subr.mxu0 0.0
    %191 = vmatpush1.msra.mxu0 0.0
    %192 = vmatprep.subr.mxu0 0.0
    %193 = vmatpush1.msra.mxu0 0.0
    %194 = vmatprep.subr.mxu0 0.0
    %195 = vmatpush1.msra.mxu0 0.0
    %196 = vmatprep.subr.mxu0 0.0
    %197 = vmatpush1.msra.mxu0 0.0
    %198 = vmatprep.subr.mxu0 0.0
    %199 = vmatpush1.msra.mxu0 0.0
    %200 = vmatprep.subr.mxu0 0.0
    %201 = vmatpush1.msra.mxu0 0.0
    %202 = vmatprep.subr.mxu0 0.0
    %203 = vmatpush1.msra.mxu0 0.0
    %204 = vmatprep.subr.mxu0 0.0
    %205 = vmatpush1.msra.mxu0 0.0
    %206 = vmatprep.subr.mxu0 0.0
    %207 = vmatpush1.msra.mxu0 0.0
    %208 = vmatprep.subr.mxu0 0.0
    %209 = vmatpush1.msra.mxu0 0.0
    %210 = vmatprep.subr.mxu0 0.0
    %211 = vmatpush1.msra.mxu0 0.0
    %212 = vmatprep.subr.mxu0 0.0
    %213 = vmatpush1.msra.mxu0 0.0
    %214 = vmatprep.mubr.f32.mxu0 0.0
    %215 = vmatmul.mubr.f32.gmra.mrb[0].mxu0 %v145
    %v216 = vpop.f32.mrb[0].mxu0
    %v217 = vadd.f32 0.0, %v216
    %v218 = vpop.f32.mrb[0].mxu0
    %219 = vmatprep.mubr.f32.mxu0 0.0
    %220 = vmatmul.mubr.f32.gmra.mrb[0].mxu0 %v148
    %v221 = vpop.f32.mrb[0].mxu0
    %v222 = vadd.f32 0.0, %v221
    %v223 = vpop.f32.mrb[0].mxu0
    %224 = vdwg.mxu0
    %225 = vst [vmem:[#allocation5] sm:$0xff] %v217
    %226 = vst [vmem:[#allocation5 + $0x8] sm:$0xff] %v222
    // Predicated region
    $region18: #{tpu_custom_call.1} parent=1 // pred_check
      _
    $region19: #{tpu_custom_call.1} parent=1 // pred_check_branch
      %228 = sbr.rel (0) target = $region21
    $region20: #{tpu_custom_call.1} parent=1 // pred_region
      %s230 = ssub.s32 256, 256
      %231 = vsyncadd [#allocation4], %s230
      %s232 = sshll.u32 [#allocation5], 4
      %s233 = int_to_ptr.vmem [resolvable:$true] %s232
      %238 = dma.vmem_to_hbm [thread:$0]  %s233, 256, %s3, [#allocation4], 128, 128, 8
    $region21: #{tpu_custom_call.1} parent=1 // pred_fallthru
      _
    // Predicated region
    $region22: #{tpu_custom_call.1} parent=1 // pred_check
      _
    $region23: #{tpu_custom_call.1} parent=1 // pred_check_branch
      %240 = sbr.rel (0) target = $region25
    $region24: #{tpu_custom_call.1} parent=1 // pred_region
      %241 = dma.done [#allocation4], 256
    $region25: #{tpu_custom_call.1} parent=1 // pred_fallthru
      _
    %242 = vsyncpa [#allocation3], 1
    %243 = vsyncpa [#allocation4], 1

</llo_original>
